<compile_context>
chip_gen: v7x
topology: tpu7x:2x2x1
jax: 0.10.0
libtpu: 0.0.40
codegen_flags: <defaults>
</compile_context>

<pallas_src>
import functools

import jax
import jax.numpy as jnp
from jax.experimental import pallas as pl
from jax.experimental.pallas import tpu as pltpu

LANE = 128


def actor_kernel(x_ref, w1_ref, b1_ref, w2_ref, b2_ref, w3_ref, b3_ref,
                 wm_ref, bm_ref, mean_ref):
    # x / weights are bf16; accumulate + elementwise in f32.
    x = x_ref[...]
    h1 = jnp.maximum(
        jnp.dot(x, w1_ref[...], preferred_element_type=jnp.float32)
        + b1_ref[...], 0.0)
    h2 = jnp.maximum(
        jnp.dot(h1.astype(jnp.bfloat16), w2_ref[...],
                preferred_element_type=jnp.float32) + b2_ref[...], 0.0)
    h3 = jnp.maximum(
        jnp.dot(h2.astype(jnp.bfloat16), w3_ref[...],
                preferred_element_type=jnp.float32) + b3_ref[...], 0.0)
    m = jnp.tanh(
        jnp.dot(h3.astype(jnp.bfloat16), wm_ref[...],
                preferred_element_type=jnp.float32) + bm_ref[...])
    mean_ref[...] = m.astype(mean_ref.dtype)


def init_actor_params(key, state_size, action_size):
    """Deterministic init mimicking PyTorch nn.Linear default:
    U(-1/sqrt(fan_in), 1/sqrt(fan_in)) for weight and bias.  Stored f32."""
    dims = [(state_size, 512), (512, 256), (256, 64), (64, action_size)]
    names = ["1", "2", "3", "m"]
    params = {}
    keys = jax.random.split(key, 2 * len(dims))
    for i, ((fan_in, fan_out), n) in enumerate(zip(dims, names)):
        bound = 1.0 / jnp.sqrt(jnp.float32(fan_in))
        params[f"w{n}"] = jax.random.uniform(
            keys[2 * i], (fan_in, fan_out), jnp.float32, -bound, bound)
        params[f"b{n}"] = jax.random.uniform(
            keys[2 * i + 1], (1, fan_out), jnp.float32, -bound, bound)
    params["log_std"] = jnp.zeros((1, action_size), jnp.float32)
    return params


def prepare_actor_params(params):
    """One-time (per parameter update) prep for the kernel:
       - cast matmul weights to bf16 (biases stay f32 for the f32 accumulator)
       - zero-pad the head to a lane-dense 128-wide output
       - precompute std = exp(log_std) outside the kernel."""
    action_size = params["wm"].shape[1]
    wm_pad = jnp.zeros((params["wm"].shape[0], LANE), jnp.float32)
    wm_pad = wm_pad.at[:, :action_size].set(params["wm"])
    bm_pad = jnp.zeros((1, LANE), jnp.float32)
    bm_pad = bm_pad.at[:, :action_size].set(params["bm"])
    weights = {
        "w1": params["w1"].astype(jnp.bfloat16), "b1": params["b1"],
        "w2": params["w2"].astype(jnp.bfloat16), "b2": params["b2"],
        "w3": params["w3"].astype(jnp.bfloat16), "b3": params["b3"],
        "wm": wm_pad.astype(jnp.bfloat16), "bm": bm_pad,
    }
    return {
        "weights": weights,
        "std": jnp.exp(params["log_std"][0]),          # (A,) f32, constant
        "action_size": action_size,
    }


def _batch_tiling(batch, tile_b):
    """Pick the batch tile: tiny batches use one sublane-aligned tile; large
    batches use `tile_b` rows per grid step (128 on v5e, 256 on v6e/v7x)."""
    b_aligned = max(8, pl.cdiv(batch, 8) * 8)
    if b_aligned <= tile_b:
        return b_aligned, b_aligned
    b_pad = pl.cdiv(batch, tile_b) * tile_b
    return tile_b, b_pad


@functools.partial(jax.jit, static_argnames=("tile_b",))
def _actor_forward_mean(state, weights, *, tile_b):
    batch, state_size = state.shape
    tile, b_pad = _batch_tiling(batch, tile_b)
    x = state.astype(jnp.bfloat16)
    if b_pad != batch:
        x = jnp.pad(x, ((0, b_pad - batch), (0, 0)))

    def resident(shape):
        # Constant block index -> weights/biases stay VMEM-resident across
        # batch-tile grid steps (no re-DMA).
        return pl.BlockSpec(shape, lambda i: (0, 0))

    mean_pad = pl.pallas_call(
        actor_kernel,
        grid=(b_pad // tile,),
        in_specs=[
            pl.BlockSpec((tile, state_size), lambda i: (i, 0)),   # state tile
            resident(weights["w1"].shape), resident(weights["b1"].shape),
            resident(weights["w2"].shape), resident(weights["b2"].shape),
            resident(weights["w3"].shape), resident(weights["b3"].shape),
            resident(weights["wm"].shape), resident(weights["bm"].shape),
        ],
        out_specs=pl.BlockSpec((tile, LANE), lambda i: (i, 0)),
        out_shape=jax.ShapeDtypeStruct((b_pad, LANE), jnp.float32),
        compiler_params=pltpu.CompilerParams(
            dimension_semantics=("parallel",)),   # 2 TCs on v7x share batch
    )(
        x,
        weights["w1"], weights["b1"],
        weights["w2"], weights["b2"],
        weights["w3"], weights["b3"],
        weights["wm"], weights["bm"],
    )
    return mean_pad


def actor_forward(state, kparams, tile_b=256):
    """Returns (mean, std) matching Actor.forward: mean (B, A), std (A,).
    Use tile_b=128 on v5e, 256 on v6e/v7x."""
    batch = state.shape[0]
    action_size = kparams["action_size"]
    mean_pad = _actor_forward_mean(state, kparams["weights"], tile_b=tile_b)
    return mean_pad[:batch, :action_size], kparams["std"]


def actor_forward_ref(state, params):
    """Pure-JAX f32 reference for correctness checking."""
    h = jnp.maximum(state @ params["w1"] + params["b1"], 0.0)
    h = jnp.maximum(h @ params["w2"] + params["b2"], 0.0)
    h = jnp.maximum(h @ params["w3"] + params["b3"], 0.0)
    mean = jnp.tanh(h @ params["wm"] + params["bm"])
    return mean, jnp.exp(params["log_std"][0])


if __name__ == "__main__":
    batch = 2
    state_size = 16
    action_size = 4

    key = jax.random.PRNGKey(0)
    pkey, xkey = jax.random.split(key)
    params = init_actor_params(pkey, state_size, action_size)
    kparams = prepare_actor_params(params)
    state = jax.random.normal(xkey, (batch, state_size), jnp.float32)

    mean, std = actor_forward(state, kparams)
    jax.block_until_ready((mean, std))

    mean_ref, std_ref = actor_forward_ref(state, params)
    assert mean.shape == (batch, action_size)
    assert std.shape == (action_size,)
    # bf16 matmul operands with f32 accumulation -> loosened tolerance vs the
    # pure-f32 reference.
    assert jnp.allclose(mean, mean_ref, atol=2e-2, rtol=2e-2)
    assert jnp.allclose(std, std_ref, atol=1e-6, rtol=1e-6)

    print("KERNEL_OK")
</pallas_src>

<mosaic_0001>
module attributes {stable_mosaic.version = 11 : i64} {
  func.func @actor_kernel(%arg0: i32, %arg1: memref<8x16xbf16, #tpu.memory_space<vmem>>, %arg2: memref<16x512xbf16, #tpu.memory_space<vmem>>, %arg3: memref<1x512xf32, #tpu.memory_space<vmem>>, %arg4: memref<512x256xbf16, #tpu.memory_space<vmem>>, %arg5: memref<1x256xf32, #tpu.memory_space<vmem>>, %arg6: memref<256x64xbf16, #tpu.memory_space<vmem>>, %arg7: memref<1x64xf32, #tpu.memory_space<vmem>>, %arg8: memref<64x128xbf16, #tpu.memory_space<vmem>>, %arg9: memref<1x128xf32, #tpu.memory_space<vmem>>, %arg10: memref<8x128xf32, #tpu.memory_space<vmem>>) attributes {dimension_semantics = [#tpu.dimension_semantics<parallel>], iteration_bounds = array<i64: 1>, scalar_prefetch = 0 : i64, scratch_operands = 0 : i64, tpu.core_type = #tpu.core_type<tc>, window_params = [{transform_indices = @transform_0, window_bounds = array<i64: 8, 16>}, {pipeline_mode = #tpu.pipeline_mode<synchronous>, transform_indices = @transform_1, window_bounds = array<i64: 16, 512>}, {pipeline_mode = #tpu.pipeline_mode<synchronous>, transform_indices = @transform_2, window_bounds = array<i64: 1, 512>}, {pipeline_mode = #tpu.pipeline_mode<synchronous>, transform_indices = @transform_3, window_bounds = array<i64: 512, 256>}, {pipeline_mode = #tpu.pipeline_mode<synchronous>, transform_indices = @transform_4, window_bounds = array<i64: 1, 256>}, {pipeline_mode = #tpu.pipeline_mode<synchronous>, transform_indices = @transform_5, window_bounds = array<i64: 256, 64>}, {pipeline_mode = #tpu.pipeline_mode<synchronous>, transform_indices = @transform_6, window_bounds = array<i64: 1, 64>}, {pipeline_mode = #tpu.pipeline_mode<synchronous>, transform_indices = @transform_7, window_bounds = array<i64: 64, 128>}, {pipeline_mode = #tpu.pipeline_mode<synchronous>, transform_indices = @transform_8, window_bounds = array<i64: 1, 128>}, {transform_indices = @transform_9, window_bounds = array<i64: 8, 128>}]} {
    %c0 = arith.constant 0 : index
    %c0_0 = arith.constant 0 : index
    %0 = vector.load %arg1[%c0, %c0_0] : memref<8x16xbf16, #tpu.memory_space<vmem>>, vector<8x16xbf16>
    %c0_1 = arith.constant 0 : index
    %c0_2 = arith.constant 0 : index
    %1 = vector.load %arg2[%c0_1, %c0_2] : memref<16x512xbf16, #tpu.memory_space<vmem>>, vector<16x512xbf16>
    %cst = arith.constant dense<0.000000e+00> : vector<8x512xf32>
    %2 = tpu.matmul %0, %1, %cst {dimension_numbers = #tpu.dot_dimension_numbers<[1], [0], [0], [1], [0, 0, 1, 1], [], []>} : vector<8x16xbf16>, vector<16x512xbf16>, vector<8x512xf32> -> vector<8x512xf32>
    %c0_3 = arith.constant 0 : index
    %c0_4 = arith.constant 0 : index
    %3 = vector.load %arg3[%c0_3, %c0_4] : memref<1x512xf32, #tpu.memory_space<vmem>>, vector<1x512xf32>
    %4 = vector.broadcast %3 : vector<1x512xf32> to vector<8x512xf32>
    %5 = arith.addf %2, %4 : vector<8x512xf32>
    %cst_5 = arith.constant 0.000000e+00 : f32
    %6 = vector.broadcast %cst_5 : f32 to vector<8x512xf32>
    %7 = arith.maximumf %5, %6 : vector<8x512xf32>
    %8 = arith.truncf %7 : vector<8x512xf32> to vector<8x512xbf16>
    %c0_6 = arith.constant 0 : index
    %c0_7 = arith.constant 0 : index
    %9 = vector.load %arg4[%c0_6, %c0_7] : memref<512x256xbf16, #tpu.memory_space<vmem>>, vector<512x256xbf16>
    %cst_8 = arith.constant dense<0.000000e+00> : vector<8x256xf32>
    %10 = tpu.matmul %8, %9, %cst_8 {dimension_numbers = #tpu.dot_dimension_numbers<[1], [0], [0], [1], [0, 0, 1, 1], [], []>} : vector<8x512xbf16>, vector<512x256xbf16>, vector<8x256xf32> -> vector<8x256xf32>
    %c0_9 = arith.constant 0 : index
    %c0_10 = arith.constant 0 : index
    %11 = vector.load %arg5[%c0_9, %c0_10] : memref<1x256xf32, #tpu.memory_space<vmem>>, vector<1x256xf32>
    %12 = vector.broadcast %11 : vector<1x256xf32> to vector<8x256xf32>
    %13 = arith.addf %10, %12 : vector<8x256xf32>
    %cst_11 = arith.constant 0.000000e+00 : f32
    %14 = vector.broadcast %cst_11 : f32 to vector<8x256xf32>
    %15 = arith.maximumf %13, %14 : vector<8x256xf32>
    %16 = arith.truncf %15 : vector<8x256xf32> to vector<8x256xbf16>
    %c0_12 = arith.constant 0 : index
    %c0_13 = arith.constant 0 : index
    %17 = vector.load %arg6[%c0_12, %c0_13] : memref<256x64xbf16, #tpu.memory_space<vmem>>, vector<256x64xbf16>
    %cst_14 = arith.constant dense<0.000000e+00> : vector<8x64xf32>
    %18 = tpu.matmul %16, %17, %cst_14 {dimension_numbers = #tpu.dot_dimension_numbers<[1], [0], [0], [1], [0, 0, 1, 1], [], []>} : vector<8x256xbf16>, vector<256x64xbf16>, vector<8x64xf32> -> vector<8x64xf32>
    %c0_15 = arith.constant 0 : index
    %c0_16 = arith.constant 0 : index
    %19 = vector.load %arg7[%c0_15, %c0_16] : memref<1x64xf32, #tpu.memory_space<vmem>>, vector<1x64xf32>
    %20 = vector.broadcast %19 : vector<1x64xf32> to vector<8x64xf32>
    %21 = arith.addf %18, %20 : vector<8x64xf32>
    %cst_17 = arith.constant 0.000000e+00 : f32
    %22 = vector.broadcast %cst_17 : f32 to vector<8x64xf32>
    %23 = arith.maximumf %21, %22 : vector<8x64xf32>
    %24 = arith.truncf %23 : vector<8x64xf32> to vector<8x64xbf16>
    %c0_18 = arith.constant 0 : index
    %c0_19 = arith.constant 0 : index
    %25 = vector.load %arg8[%c0_18, %c0_19] : memref<64x128xbf16, #tpu.memory_space<vmem>>, vector<64x128xbf16>
    %cst_20 = arith.constant dense<0.000000e+00> : vector<8x128xf32>
    %26 = tpu.matmul %24, %25, %cst_20 {dimension_numbers = #tpu.dot_dimension_numbers<[1], [0], [0], [1], [0, 0, 1, 1], [], []>} : vector<8x64xbf16>, vector<64x128xbf16>, vector<8x128xf32> -> vector<8x128xf32>
    %c0_21 = arith.constant 0 : index
    %c0_22 = arith.constant 0 : index
    %27 = vector.load %arg9[%c0_21, %c0_22] : memref<1x128xf32, #tpu.memory_space<vmem>>, vector<1x128xf32>
    %28 = vector.broadcast %27 : vector<1x128xf32> to vector<8x128xf32>
    %29 = arith.addf %26, %28 : vector<8x128xf32>
    %30 = math.tanh %29 : vector<8x128xf32>
    %c0_23 = arith.constant 0 : index
    %c0_24 = arith.constant 0 : index
    %31 = vector.load %arg10[%c0_23, %c0_24] : memref<8x128xf32, #tpu.memory_space<vmem>>, vector<8x128xf32>
    tpu.vector_store %arg10[%c0_23, %c0_24], %30 {strides = array<i32>} : memref<8x128xf32, #tpu.memory_space<vmem>>, vector<8x128xf32>,
    return
  }
  func.func @transform_0(%arg0: i32) -> (i32, i32) {
    %c0_i32 = arith.constant 0 : i32
    %c0_i32_0 = arith.constant 0 : i32
    return %arg0, %c0_i32 : i32, i32
  }
  func.func @transform_1(%arg0: i32) -> (i32, i32) {
    %c0_i32 = arith.constant 0 : i32
    %c0_i32_0 = arith.constant 0 : i32
    %c0_i32_1 = arith.constant 0 : i32
    return %c0_i32, %c0_i32_0 : i32, i32
  }
  func.func @transform_2(%arg0: i32) -> (i32, i32) {
    %c0_i32 = arith.constant 0 : i32
    %c0_i32_0 = arith.constant 0 : i32
    %c0_i32_1 = arith.constant 0 : i32
    return %c0_i32, %c0_i32_0 : i32, i32
  }
  func.func @transform_3(%arg0: i32) -> (i32, i32) {
    %c0_i32 = arith.constant 0 : i32
    %c0_i32_0 = arith.constant 0 : i32
    %c0_i32_1 = arith.constant 0 : i32
    return %c0_i32, %c0_i32_0 : i32, i32
  }
  func.func @transform_4(%arg0: i32) -> (i32, i32) {
    %c0_i32 = arith.constant 0 : i32
    %c0_i32_0 = arith.constant 0 : i32
    %c0_i32_1 = arith.constant 0 : i32
    return %c0_i32, %c0_i32_0 : i32, i32
  }
  func.func @transform_5(%arg0: i32) -> (i32, i32) {
    %c0_i32 = arith.constant 0 : i32
    %c0_i32_0 = arith.constant 0 : i32
    %c0_i32_1 = arith.constant 0 : i32
    return %c0_i32, %c0_i32_0 : i32, i32
  }
  func.func @transform_6(%arg0: i32) -> (i32, i32) {
    %c0_i32 = arith.constant 0 : i32
    %c0_i32_0 = arith.constant 0 : i32
    %c0_i32_1 = arith.constant 0 : i32
    return %c0_i32, %c0_i32_0 : i32, i32
  }
  func.func @transform_7(%arg0: i32) -> (i32, i32) {
    %c0_i32 = arith.constant 0 : i32
    %c0_i32_0 = arith.constant 0 : i32
    %c0_i32_1 = arith.constant 0 : i32
    return %c0_i32, %c0_i32_0 : i32, i32
  }
  func.func @transform_8(%arg0: i32) -> (i32, i32) {
    %c0_i32 = arith.constant 0 : i32
    %c0_i32_0 = arith.constant 0 : i32
    %c0_i32_1 = arith.constant 0 : i32
    return %c0_i32, %c0_i32_0 : i32, i32
  }
  func.func @transform_9(%arg0: i32) -> (i32, i32) {
    %c0_i32 = arith.constant 0 : i32
    %c0_i32_0 = arith.constant 0 : i32
    return %arg0, %c0_i32 : i32, i32
  }
}

</mosaic_0001>

<llo_original>
// kernel: _actor_forward_mean.1
$region0: #{_actor_forward_mean.1}
  #allocation0 [shape = 'u32[]', space=smem, size = 0x4, offset = 0x4, fixed_abs, tag = 'smem constant byte address 0x4 - core index']
  #allocation1 [shape = 'u32[144,128]{1,0:T(1,128)}', space=vmem, size = 0x12000, scoped, tag = 'internal scratch']
  %s0 = inlined_call_operand.vmem [shape: bf16[8,16], index: 0, kind: input, shape index: {}]
  %s1 = inlined_call_operand.vmem [shape: bf16[16,512], index: 1, kind: input, shape index: {}]
  %s2 = inlined_call_operand.vmem [shape: f32[1,512], index: 2, kind: input, shape index: {}]
  %s3 = inlined_call_operand.hbm [shape: bf16[512,256], index: 3, kind: input, shape index: {}]
  %s4 = inlined_call_operand.vmem [shape: f32[1,256], index: 4, kind: input, shape index: {}]
  %s5 = inlined_call_operand.vmem [shape: bf16[256,64], index: 5, kind: input, shape index: {}]
  %s6 = inlined_call_operand.vmem [shape: f32[1,64], index: 6, kind: input, shape index: {}]
  %s7 = inlined_call_operand.vmem [shape: bf16[64,128], index: 7, kind: input, shape index: {}]
  %s8 = inlined_call_operand.vmem [shape: f32[1,128], index: 8, kind: input, shape index: {}]
  %s9 = inlined_call_operand.hbm [shape: f32[8,128], index: 9, kind: output, shape index: {}]
  %s10 = sld [smem:[#allocation0]]
  $region50: #{_actor_forward_mean.1} parent=0
    _
  %s12 = ssub.s32 1, %s10
  %s13 = scalar_select 0, %s12, %s10
  $region1: #{_actor_forward_mean.1} parent=0
    #allocation2 [shape = 'u8[262144]{0}', space=vmem, size = 0x40000, scoped, tag = 'input window, operand 3, single buffered']
    #allocation3 [shape = 's32[1]{0}', space=sflag, size = 0x4, scoped, tag = 'scoped memory for _actor_forward_mean.1']
    #allocation4 [shape = 's32[1]{0}', space=sflag, size = 0x4, scoped, tag = 'scoped memory for _actor_forward_mean.1']
    #allocation5 [shape = 'u8[4096]{0}', space=vmem, size = 0x1000, scoped, tag = 'output window, operand 0, single buffered']
    %14 = vsyncpa [#allocation3], 0
    %15 = vsyncpa [#allocation4], 0
    // Predicated region
    $region2: #{_actor_forward_mean.1} parent=1 // pred_check
      _
    $region3: #{_actor_forward_mean.1} parent=1 // pred_check_branch
      %17 = sbr.rel (0) target = $region5
    $region4: #{_actor_forward_mean.1} parent=1 // pred_region
      _
    $region5: #{_actor_forward_mean.1} parent=1 // pred_fallthru
      _
    // Predicated region
    $region6: #{_actor_forward_mean.1} parent=1 // pred_check
      _
    $region7: #{_actor_forward_mean.1} parent=1 // pred_check_branch
      %19 = sbr.rel (0) target = $region9
    $region8: #{_actor_forward_mean.1} parent=1 // pred_region
      _
    $region9: #{_actor_forward_mean.1} parent=1 // pred_fallthru
      _
    // Predicated region
    $region10: #{_actor_forward_mean.1} parent=1 // pred_check
      _
    $region11: #{_actor_forward_mean.1} parent=1 // pred_check_branch
      %21 = sbr.rel (0) target = $region13
    $region12: #{_actor_forward_mean.1} parent=1 // pred_region
      _
    $region13: #{_actor_forward_mean.1} parent=1 // pred_fallthru
      _
    // Predicated region
    $region14: #{_actor_forward_mean.1} parent=1 // pred_check
      _
    $region15: #{_actor_forward_mean.1} parent=1 // pred_check_branch
      %23 = sbr.rel (0) target = $region17
    $region16: #{_actor_forward_mean.1} parent=1 // pred_region
      %s25 = ssub.s32 8192, 8192
      %26 = vsyncadd [#allocation3], %s25
      %s27 = sshll.u32 [#allocation2], 4
      %s28 = int_to_ptr.vmem [resolvable:$true] %s27
      %33 = dma.hbm_to_vmem [thread:$0]  %s3, 8192, %s28, [#allocation3], 128, 128, 8
    $region17: #{_actor_forward_mean.1} parent=1 // pred_fallthru
      _
    // Predicated region
    $region18: #{_actor_forward_mean.1} parent=1 // pred_check
      _
    $region19: #{_actor_forward_mean.1} parent=1 // pred_check_branch
      %35 = sbr.rel (0) target = $region21
    $region20: #{_actor_forward_mean.1} parent=1 // pred_region
      _
    $region21: #{_actor_forward_mean.1} parent=1 // pred_fallthru
      _
    // Predicated region
    $region22: #{_actor_forward_mean.1} parent=1 // pred_check
      _
    $region23: #{_actor_forward_mean.1} parent=1 // pred_check_branch
      %37 = sbr.rel (0) target = $region25
    $region24: #{_actor_forward_mean.1} parent=1 // pred_region
      _
    $region25: #{_actor_forward_mean.1} parent=1 // pred_fallthru
      _
    // Predicated region
    $region26: #{_actor_forward_mean.1} parent=1 // pred_check
      _
    $region27: #{_actor_forward_mean.1} parent=1 // pred_check_branch
      %39 = sbr.rel (0) target = $region29
    $region28: #{_actor_forward_mean.1} parent=1 // pred_region
      _
    $region29: #{_actor_forward_mean.1} parent=1 // pred_fallthru
      _
    // Predicated region
    $region30: #{_actor_forward_mean.1} parent=1 // pred_check
      _
    $region31: #{_actor_forward_mean.1} parent=1 // pred_check_branch
      %41 = sbr.rel (0) target = $region33
    $region32: #{_actor_forward_mean.1} parent=1 // pred_region
      _
    $region33: #{_actor_forward_mean.1} parent=1 // pred_fallthru
      _
    // Predicated region
    $region34: #{_actor_forward_mean.1} parent=1 // pred_check
      _
    $region35: #{_actor_forward_mean.1} parent=1 // pred_check_branch
      %43 = sbr.rel (0) target = $region37
    $region36: #{_actor_forward_mean.1} parent=1 // pred_region
      _
    $region37: #{_actor_forward_mean.1} parent=1 // pred_fallthru
      _
    // Predicated region
    $region38: #{_actor_forward_mean.1} parent=1 // pred_check
      _
    $region39: #{_actor_forward_mean.1} parent=1 // pred_check_branch
      %45 = sbr.rel (0) target = $region41
    $region40: #{_actor_forward_mean.1} parent=1 // pred_region
      %46 = dma.done [#allocation3], 8192
    $region41: #{_actor_forward_mean.1} parent=1 // pred_fallthru
      _
    %v48 = vld [vmem:[%s0] sm:$0xf]
    %v49 = vld [vmem:[%s1] sm:$0xff]
    %v50 = vld [vmem:[%s1 + $0x8] sm:$0xff]
    %v51 = vld [vmem:[%s1 + $0x10] sm:$0xff]
    %v52 = vld [vmem:[%s1 + $0x18] sm:$0xff]
    %v53 = vld [vmem:[%s2] sm:$0xf]
    %v55 = vlaneseq
    %v56 = vshrl.u32 %v55, 7
    %v57 = vsub.s32 0, %v56
    %v58 = vrot.slane %v53, %v57
    %v59 = vlaneseq
    %v60 = vshrl.u32 %v59, 7
    %v61 = vsub.s32 1, %v60
    %v62 = vrot.slane %v53, %v61
    %v63 = vlaneseq
    %v64 = vshrl.u32 %v63, 7
    %v65 = vsub.s32 2, %v64
    %v66 = vrot.slane %v53, %v65
    %v67 = vlaneseq
    %v68 = vshrl.u32 %v67, 7
    %v69 = vsub.s32 3, %v68
    %v70 = vrot.slane %v53, %v69
    %v79 = vunpack.c.l.b16 %v49
    %v80 = vunpack.c.h.b16 %v49
    %v81 = vunpack.c.l.b16 %v50
    %v82 = vunpack.c.h.b16 %v50
    %v83 = vunpack.c.l.b16 %v51
    %v84 = vunpack.c.h.b16 %v51
    %v85 = vunpack.c.l.b16 %v52
    %v86 = vunpack.c.h.b16 %v52
    %v87 = vpack.c.b16 %v83, %v79
    %v88 = vpack.c.b16 %v84, %v80
    %v89 = vpack.c.b16 %v85, %v81
    %v90 = vpack.c.b16 %v86, %v82
    %vm95 = vcmask 130048
    %v97 = vsel %vm95, %v48, 0
    %99 = vmatprep.subr.bf16.mxu0 %v88
    %100 = vmatpush1.bf16.msra.mxu0 %v87
    %101 = vmatprep.subr.bf16.mxu0 0
    %102 = vmatpush1.bf16.msra.mxu0 0
    %103 = vmatprep.subr.bf16.mxu0 0
    %104 = vmatpush1.bf16.msra.mxu0 0
    %105 = vmatprep.subr.bf16.mxu0 0
    %106 = vmatpush1.bf16.msra.mxu0 0
    %107 = vmatprep.subr.bf16.mxu0 0
    %108 = vmatpush1.bf16.msra.mxu0 0
    %109 = vmatprep.subr.bf16.mxu0 0
    %110 = vmatpush1.bf16.msra.mxu0 0
    %111 = vmatprep.subr.bf16.mxu0 0
    %112 = vmatpush1.bf16.msra.mxu0 0
    %113 = vmatprep.subr.bf16.mxu0 0
    %114 = vmatpush1.bf16.msra.mxu0 0
    %115 = vmatprep.subr.bf16.mxu0 0
    %116 = vmatpush1.bf16.msra.mxu0 0
    %117 = vmatprep.subr.bf16.mxu0 0
    %118 = vmatpush1.bf16.msra.mxu0 0
    %119 = vmatprep.subr.bf16.mxu0 0
    %120 = vmatpush1.bf16.msra.mxu0 0
    %121 = vmatprep.subr.bf16.mxu0 0
    %122 = vmatpush1.bf16.msra.mxu0 0
    %123 = vmatprep.subr.bf16.mxu0 0
    %124 = vmatpush1.bf16.msra.mxu0 0
    %125 = vmatprep.subr.bf16.mxu0 0
    %126 = vmatpush1.bf16.msra.mxu0 0
    %127 = vmatprep.subr.bf16.mxu0 0
    %128 = vmatpush1.bf16.msra.mxu0 0
    %129 = vmatprep.subr.bf16.mxu0 0
    %130 = vmatpush1.bf16.msra.mxu0 0
    %131 = vmatprep.mubr.bf16.mxu0 0
    %132 = vmatmul.mubr.bf16.gmra.mrb[0].mxu0 %v97
    %v133 = vpop.f32.mrb[0].mxu0
    %v134 = vadd.f32 %v58, %v133
    %v135 = vpop.f32.mrb[0].mxu0
    %v136 = vadd.f32 %v62, %v135
    %v137 = vpop.f32.mrb[0].mxu0
    %v138 = vpop.f32.mrb[0].mxu0
    %139 = vdwg.mxu0
    %140 = vmatprep.subr.bf16.mxu0 %v90
    %141 = vmatpush1.bf16.msra.mxu0 %v89
    %142 = vmatprep.subr.bf16.mxu0 0
    %143 = vmatpush1.bf16.msra.mxu0 0
    %144 = vmatprep.subr.bf16.mxu0 0
    %145 = vmatpush1.bf16.msra.mxu0 0
    %146 = vmatprep.subr.bf16.mxu0 0
    %147 = vmatpush1.bf16.msra.mxu0 0
    %148 = vmatprep.subr.bf16.mxu0 0
    %149 = vmatpush1.bf16.msra.mxu0 0
    %150 = vmatprep.subr.bf16.mxu0 0
    %151 = vmatpush1.bf16.msra.mxu0 0
    %152 = vmatprep.subr.bf16.mxu0 0
    %153 = vmatpush1.bf16.msra.mxu0 0
    %154 = vmatprep.subr.bf16.mxu0 0
    %155 = vmatpush1.bf16.msra.mxu0 0
    %156 = vmatprep.subr.bf16.mxu0 0
    %157 = vmatpush1.bf16.msra.mxu0 0
    %158 = vmatprep.subr.bf16.mxu0 0
    %159 = vmatpush1.bf16.msra.mxu0 0
    %160 = vmatprep.subr.bf16.mxu0 0
    %161 = vmatpush1.bf16.msra.mxu0 0
    %162 = vmatprep.subr.bf16.mxu0 0
    %163 = vmatpush1.bf16.msra.mxu0 0
    %164 = vmatprep.subr.bf16.mxu0 0
    %165 = vmatpush1.bf16.msra.mxu0 0
    %166 = vmatprep.subr.bf16.mxu0 0
    %167 = vmatpush1.bf16.msra.mxu0 0
    %168 = vmatprep.subr.bf16.mxu0 0
    %169 = vmatpush1.bf16.msra.mxu0 0
    %170 = vmatprep.subr.bf16.mxu0 0
    %171 = vmatpush1.bf16.msra.mxu0 0
    %172 = vmatprep.mubr.bf16.mxu0 0
    %173 = vmatmul.mubr.bf16.gmra.mrb[0].mxu0 %v97
    %v174 = vpop.f32.mrb[0].mxu0
    %v175 = vadd.f32 %v66, %v174
    %v176 = vpop.f32.mrb[0].mxu0
    %v177 = vadd.f32 %v70, %v176
    %v178 = vpop.f32.mrb[0].mxu0
    %v179 = vpop.f32.mrb[0].mxu0
    %180 = vdwg.mxu0
    %v181 = vmax.f32 %v134, 0.0
    %v182 = vmax.f32 %v136, 0.0
    %v183 = vmax.f32 %v175, 0.0
    %v184 = vmax.f32 %v177, 0.0
    %v185 = vpack.c.bf16 %v181, %v181
    %v186 = vpack.c.bf16 %v182, %v182
    %v187 = vpack.c.bf16 %v183, %v183
    %v188 = vpack.c.bf16 %v184, %v184
    %v189 = vld [vmem:[#allocation2] sm:$0xff]
    %v190 = vld [vmem:[#allocation2 + $0x8] sm:$0xff]
    %v191 = vld [vmem:[#allocation2 + $0x10] sm:$0xff]
    %v192 = vld [vmem:[#allocation2 + $0x18] sm:$0xff]
    %v193 = vld [vmem:[#allocation2 + $0x20] sm:$0xff]
    %v194 = vld [vmem:[#allocation2 + $0x28] sm:$0xff]
    %v195 = vld [vmem:[#allocation2 + $0x30] sm:$0xff]
    %v196 = vld [vmem:[#allocation2 + $0x38] sm:$0xff]
    %v197 = vld [vmem:[#allocation2 + $0x40] sm:$0xff]
    %v198 = vld [vmem:[#allocation2 + $0x48] sm:$0xff]
    %v199 = vld [vmem:[#allocation2 + $0x50] sm:$0xff]
    %v200 = vld [vmem:[#allocation2 + $0x58] sm:$0xff]
    %v201 = vld [vmem:[#allocation2 + $0x60] sm:$0xff]
    %v202 = vld [vmem:[#allocation2 + $0x68] sm:$0xff]
    %v203 = vld [vmem:[#allocation2 + $0x70] sm:$0xff]
    %v204 = vld [vmem:[#allocation2 + $0x78] sm:$0xff]
    %v205 = vld [vmem:[#allocation2 + $0x80] sm:$0xff]
    %v206 = vld [vmem:[#allocation2 + $0x88] sm:$0xff]
    %v207 = vld [vmem:[#allocation2 + $0x90] sm:$0xff]
    %v208 = vld [vmem:[#allocation2 + $0x98] sm:$0xff]
    %v209 = vld [vmem:[#allocation2 + $0xa0] sm:$0xff]
    %v210 = vld [vmem:[#allocation2 + $0xa8] sm:$0xff]
    %v211 = vld [vmem:[#allocation2 + $0xb0] sm:$0xff]
    %v212 = vld [vmem:[#allocation2 + $0xb8] sm:$0xff]
    %v213 = vld [vmem:[#allocation2 + $0xc0] sm:$0xff]
    %v214 = vld [vmem:[#allocation2 + $0xc8] sm:$0xff]
    %v215 = vld [vmem:[#allocation2 + $0xd0] sm:$0xff]
    %v216 = vld [vmem:[#allocation2 + $0xd8] sm:$0xff]
    %v217 = vld [vmem:[#allocation2 + $0xe0] sm:$0xff]
    %v218 = vld [vmem:[#allocation2 + $0xe8] sm:$0xff]
    %v219 = vld [vmem:[#allocation2 + $0xf0] sm:$0xff]
    %v220 = vld [vmem:[#allocation2 + $0xf8] sm:$0xff]
    %v221 = vld [vmem:[#allocation2 + $0x100] sm:$0xff]
    %v222 = vld [vmem:[#allocation2 + $0x108] sm:$0xff]
    %v223 = vld [vmem:[#allocation2 + $0x110] sm:$0xff]
    %v224 = vld [vmem:[#allocation2 + $0x118] sm:$0xff]
    %v225 = vld [vmem:[#allocation2 + $0x120] sm:$0xff]
    %v226 = vld [vmem:[#allocation2 + $0x128] sm:$0xff]
    %v227 = vld [vmem:[#allocation2 + $0x130] sm:$0xff]
    %v228 = vld [vmem:[#allocation2 + $0x138] sm:$0xff]
    %v229 = vld [vmem:[#allocation2 + $0x140] sm:$0xff]
    %v230 = vld [vmem:[#allocation2 + $0x148] sm:$0xff]
    %v231 = vld [vmem:[#allocation2 + $0x150] sm:$0xff]
    %v232 = vld [vmem:[#allocation2 + $0x158] sm:$0xff]
    %v233 = vld [vmem:[#allocation2 + $0x160] sm:$0xff]
    %v234 = vld [vmem:[#allocation2 + $0x168] sm:$0xff]
    %v235 = vld [vmem:[#allocation2 + $0x170] sm:$0xff]
    %v236 = vld [vmem:[#allocation2 + $0x178] sm:$0xff]
    %v237 = vld [vmem:[#allocation2 + $0x180] sm:$0xff]
    %v238 = vld [vmem:[#allocation2 + $0x188] sm:$0xff]
    %v239 = vld [vmem:[#allocation2 + $0x190] sm:$0xff]
    %v240 = vld [vmem:[#allocation2 + $0x198] sm:$0xff]
    %v241 = vld [vmem:[#allocation2 + $0x1a0] sm:$0xff]
    %v242 = vld [vmem:[#allocation2 + $0x1a8] sm:$0xff]
    %v243 = vld [vmem:[#allocation2 + $0x1b0] sm:$0xff]
    %v244 = vld [vmem:[#allocation2 + $0x1b8] sm:$0xff]
    %v245 = vld [vmem:[#allocation2 + $0x1c0] sm:$0xff]
    %v246 = vld [vmem:[#allocation2 + $0x1c8] sm:$0xff]
    %v247 = vld [vmem:[#allocation2 + $0x1d0] sm:$0xff]
    %v248 = vld [vmem:[#allocation2 + $0x1d8] sm:$0xff]
    %v249 = vld [vmem:[#allocation2 + $0x1e0] sm:$0xff]
    %v250 = vld [vmem:[#allocation2 + $0x1e8] sm:$0xff]
    %v251 = vld [vmem:[#allocation2 + $0x1f0] sm:$0xff]
    %v252 = vld [vmem:[#allocation2 + $0x1f8] sm:$0xff]
    %v253 = vld [vmem:[%s4] sm:$0x3]
    %v255 = vlaneseq
    %v256 = vshrl.u32 %v255, 7
    %v257 = vsub.s32 0, %v256
    %v258 = vrot.slane %v253, %v257
    %v259 = vlaneseq
    %v260 = vshrl.u32 %v259, 7
    %v261 = vsub.s32 1, %v260
    %v262 = vrot.slane %v253, %v261
    %v329 = vunpack.c.l.b16 %v189
    %v330 = vunpack.c.h.b16 %v189
    %v331 = vunpack.c.l.b16 %v190
    %v332 = vunpack.c.h.b16 %v190
    %v333 = vunpack.c.l.b16 %v191
    %v334 = vunpack.c.h.b16 %v191
    %v335 = vunpack.c.l.b16 %v192
    %v336 = vunpack.c.h.b16 %v192
    %v337 = vunpack.c.l.b16 %v193
    %v338 = vunpack.c.h.b16 %v193
    %v339 = vunpack.c.l.b16 %v194
    %v340 = vunpack.c.h.b16 %v194
    %v341 = vunpack.c.l.b16 %v195
    %v342 = vunpack.c.h.b16 %v195
    %v343 = vunpack.c.l.b16 %v196
    %v344 = vunpack.c.h.b16 %v196
    %v345 = vunpack.c.l.b16 %v197
    %v346 = vunpack.c.h.b16 %v197
    %v347 = vunpack.c.l.b16 %v198
    %v348 = vunpack.c.h.b16 %v198
    %v349 = vunpack.c.l.b16 %v199
    %v350 = vunpack.c.h.b16 %v199
    %v351 = vunpack.c.l.b16 %v200
    %v352 = vunpack.c.h.b16 %v200
    %v353 = vunpack.c.l.b16 %v201
    %v354 = vunpack.c.h.b16 %v201
    %v355 = vunpack.c.l.b16 %v202
    %v356 = vunpack.c.h.b16 %v202
    %v357 = vunpack.c.l.b16 %v203
    %v358 = vunpack.c.h.b16 %v203
    %v359 = vunpack.c.l.b16 %v204
    %v360 = vunpack.c.h.b16 %v204
    %v361 = vunpack.c.l.b16 %v205
    %v362 = vunpack.c.h.b16 %v205
    %v363 = vunpack.c.l.b16 %v206
    %v364 = vunpack.c.h.b16 %v206
    %v365 = vunpack.c.l.b16 %v207
    %v366 = vunpack.c.h.b16 %v207
    %v367 = vunpack.c.l.b16 %v208
    %v368 = vunpack.c.h.b16 %v208
    %v369 = vunpack.c.l.b16 %v209
    %v370 = vunpack.c.h.b16 %v209
    %v371 = vunpack.c.l.b16 %v210
    %v372 = vunpack.c.h.b16 %v210
    %v373 = vunpack.c.l.b16 %v211
    %v374 = vunpack.c.h.b16 %v211
    %v375 = vunpack.c.l.b16 %v212
    %v376 = vunpack.c.h.b16 %v212
    %v377 = vunpack.c.l.b16 %v213
    %v378 = vunpack.c.h.b16 %v213
    %v379 = vunpack.c.l.b16 %v214
    %v380 = vunpack.c.h.b16 %v214
    %v381 = vunpack.c.l.b16 %v215
    %v382 = vunpack.c.h.b16 %v215
    %v383 = vunpack.c.l.b16 %v216
    %v384 = vunpack.c.h.b16 %v216
    %v385 = vunpack.c.l.b16 %v217
    %v386 = vunpack.c.h.b16 %v217
    %v387 = vunpack.c.l.b16 %v218
    %v388 = vunpack.c.h.b16 %v218
    %v389 = vunpack.c.l.b16 %v219
    %v390 = vunpack.c.h.b16 %v219
    %v391 = vunpack.c.l.b16 %v220
    %v392 = vunpack.c.h.b16 %v220
    %v393 = vunpack.c.l.b16 %v221
    %v394 = vunpack.c.h.b16 %v221
    %v395 = vunpack.c.l.b16 %v222
    %v396 = vunpack.c.h.b16 %v222
    %v397 = vunpack.c.l.b16 %v223
    %v398 = vunpack.c.h.b16 %v223
    %v399 = vunpack.c.l.b16 %v224
    %v400 = vunpack.c.h.b16 %v224
    %v401 = vunpack.c.l.b16 %v225
    %v402 = vunpack.c.h.b16 %v225
    %v403 = vunpack.c.l.b16 %v226
    %v404 = vunpack.c.h.b16 %v226
    %v405 = vunpack.c.l.b16 %v227
    %v406 = vunpack.c.h.b16 %v227
    %v407 = vunpack.c.l.b16 %v228
    %v408 = vunpack.c.h.b16 %v228
    %v409 = vunpack.c.l.b16 %v229
    %v410 = vunpack.c.h.b16 %v229
    %v411 = vunpack.c.l.b16 %v230
    %v412 = vunpack.c.h.b16 %v230
    %v413 = vunpack.c.l.b16 %v231
    %v414 = vunpack.c.h.b16 %v231
    %v415 = vunpack.c.l.b16 %v232
    %v416 = vunpack.c.h.b16 %v232
    %v417 = vunpack.c.l.b16 %v233
    %v418 = vunpack.c.h.b16 %v233
    %v419 = vunpack.c.l.b16 %v234
    %v420 = vunpack.c.h.b16 %v234
    %v421 = vunpack.c.l.b16 %v235
    %v422 = vunpack.c.h.b16 %v235
    %v423 = vunpack.c.l.b16 %v236
    %v424 = vunpack.c.h.b16 %v236
    %v425 = vunpack.c.l.b16 %v237
    %v426 = vunpack.c.h.b16 %v237
    %v427 = vunpack.c.l.b16 %v238
    %v428 = vunpack.c.h.b16 %v238
    %v429 = vunpack.c.l.b16 %v239
    %v430 = vunpack.c.h.b16 %v239
    %v431 = vunpack.c.l.b16 %v240
    %v432 = vunpack.c.h.b16 %v240
    %v433 = vunpack.c.l.b16 %v241
    %v434 = vunpack.c.h.b16 %v241
    %v435 = vunpack.c.l.b16 %v242
    %v436 = vunpack.c.h.b16 %v242
    %v437 = vunpack.c.l.b16 %v243
    %v438 = vunpack.c.h.b16 %v243
    %v439 = vunpack.c.l.b16 %v244
    %v440 = vunpack.c.h.b16 %v244
    %v441 = vunpack.c.l.b16 %v245
    %v442 = vunpack.c.h.b16 %v245
    %v443 = vunpack.c.l.b16 %v246
    %v444 = vunpack.c.h.b16 %v246
    %v445 = vunpack.c.l.b16 %v247
    %v446 = vunpack.c.h.b16 %v247
    %v447 = vunpack.c.l.b16 %v248
    %v448 = vunpack.c.h.b16 %v248
    %v449 = vunpack.c.l.b16 %v249
    %v450 = vunpack.c.h.b16 %v249
    %v451 = vunpack.c.l.b16 %v250
    %v452 = vunpack.c.h.b16 %v250
    %v453 = vunpack.c.l.b16 %v251
    %v454 = vunpack.c.h.b16 %v251
    %v455 = vunpack.c.l.b16 %v252
    %v456 = vunpack.c.h.b16 %v252
    %v457 = vpack.c.b16 %v331, %v329
    %v458 = vpack.c.b16 %v332, %v330
    %v459 = vpack.c.b16 %v335, %v333
    %v460 = vpack.c.b16 %v336, %v334
    %v461 = vpack.c.b16 %v339, %v337
    %v462 = vpack.c.b16 %v340, %v338
    %v463 = vpack.c.b16 %v343, %v341
    %v464 = vpack.c.b16 %v344, %v342
    %v465 = vpack.c.b16 %v347, %v345
    %v466 = vpack.c.b16 %v348, %v346
    %v467 = vpack.c.b16 %v351, %v349
    %v468 = vpack.c.b16 %v352, %v350
    %v469 = vpack.c.b16 %v355, %v353
    %v470 = vpack.c.b16 %v356, %v354
    %v471 = vpack.c.b16 %v359, %v357
    %v472 = vpack.c.b16 %v360, %v358
    %v473 = vpack.c.b16 %v363, %v361
    %v474 = vpack.c.b16 %v364, %v362
    %v475 = vpack.c.b16 %v367, %v365
    %v476 = vpack.c.b16 %v368, %v366
    %v477 = vpack.c.b16 %v371, %v369
    %v478 = vpack.c.b16 %v372, %v370
    %v479 = vpack.c.b16 %v375, %v373
    %v480 = vpack.c.b16 %v376, %v374
    %v481 = vpack.c.b16 %v379, %v377
    %v482 = vpack.c.b16 %v380, %v378
    %v483 = vpack.c.b16 %v383, %v381
    %v484 = vpack.c.b16 %v384, %v382
    %v485 = vpack.c.b16 %v387, %v385
    %v486 = vpack.c.b16 %v388, %v386
    %v487 = vpack.c.b16 %v391, %v389
    %v488 = vpack.c.b16 %v392, %v390
    %v489 = vpack.c.b16 %v395, %v393
    %v490 = vpack.c.b16 %v396, %v394
    %v491 = vpack.c.b16 %v399, %v397
    %v492 = vpack.c.b16 %v400, %v398
    %v493 = vpack.c.b16 %v403, %v401
    %v494 = vpack.c.b16 %v404, %v402
    %v495 = vpack.c.b16 %v407, %v405
    %v496 = vpack.c.b16 %v408, %v406
    %v497 = vpack.c.b16 %v411, %v409
    %v498 = vpack.c.b16 %v412, %v410
    %v499 = vpack.c.b16 %v415, %v413
    %v500 = vpack.c.b16 %v416, %v414
    %v501 = vpack.c.b16 %v419, %v417
    %v502 = vpack.c.b16 %v420, %v418
    %v503 = vpack.c.b16 %v423, %v421
    %v504 = vpack.c.b16 %v424, %v422
    %v505 = vpack.c.b16 %v427, %v425
    %v506 = vpack.c.b16 %v428, %v426
    %v507 = vpack.c.b16 %v431, %v429
    %v508 = vpack.c.b16 %v432, %v430
    %v509 = vpack.c.b16 %v435, %v433
    %v510 = vpack.c.b16 %v436, %v434
    %v511 = vpack.c.b16 %v439, %v437
    %v512 = vpack.c.b16 %v440, %v438
    %v513 = vpack.c.b16 %v443, %v441
    %v514 = vpack.c.b16 %v444, %v442
    %v515 = vpack.c.b16 %v447, %v445
    %v516 = vpack.c.b16 %v448, %v446
    %v517 = vpack.c.b16 %v451, %v449
    %v518 = vpack.c.b16 %v452, %v450
    %v519 = vpack.c.b16 %v455, %v453
    %v520 = vpack.c.b16 %v456, %v454
    %585 = vmatprep.subr.bf16.mxu0 %v458
    %586 = vmatpush1.bf16.msra.mxu0 %v457
    %587 = vmatprep.subr.bf16.mxu0 %v460
    %588 = vmatpush1.bf16.msra.mxu0 %v459
    %589 = vmatprep.subr.bf16.mxu0 %v462
    %590 = vmatpush1.bf16.msra.mxu0 %v461
    %591 = vmatprep.subr.bf16.mxu0 %v464
    %592 = vmatpush1.bf16.msra.mxu0 %v463
    %593 = vmatprep.subr.bf16.mxu0 %v466
    %594 = vmatpush1.bf16.msra.mxu0 %v465
    %595 = vmatprep.subr.bf16.mxu0 %v468
    %596 = vmatpush1.bf16.msra.mxu0 %v467
    %597 = vmatprep.subr.bf16.mxu0 %v470
    %598 = vmatpush1.bf16.msra.mxu0 %v469
    %599 = vmatprep.subr.bf16.mxu0 %v472
    %600 = vmatpush1.bf16.msra.mxu0 %v471
    %601 = vmatprep.subr.bf16.mxu0 %v474
    %602 = vmatpush1.bf16.msra.mxu0 %v473
    %603 = vmatprep.subr.bf16.mxu0 %v476
    %604 = vmatpush1.bf16.msra.mxu0 %v475
    %605 = vmatprep.subr.bf16.mxu0 %v478
    %606 = vmatpush1.bf16.msra.mxu0 %v477
    %607 = vmatprep.subr.bf16.mxu0 %v480
    %608 = vmatpush1.bf16.msra.mxu0 %v479
    %609 = vmatprep.subr.bf16.mxu0 %v482
    %610 = vmatpush1.bf16.msra.mxu0 %v481
    %611 = vmatprep.subr.bf16.mxu0 %v484
    %612 = vmatpush1.bf16.msra.mxu0 %v483
    %613 = vmatprep.subr.bf16.mxu0 %v486
    %614 = vmatpush1.bf16.msra.mxu0 %v485
    %615 = vmatprep.subr.bf16.mxu0 %v488
    %616 = vmatpush1.bf16.msra.mxu0 %v487
    %617 = vmatprep.mubr.bf16.mxu0 %v186
    %618 = vmatmul.mubr.bf16.gmra.mrb[0].mxu0 %v185
    %v619 = vpop.f32.mrb[0].mxu0
    %v620 = vadd.f32 %v258, %v619
    %v621 = vpop.f32.mrb[0].mxu0
    %v622 = vadd.f32 %v262, %v621
    %v623 = vpop.f32.mrb[0].mxu0
    %v624 = vpop.f32.mrb[0].mxu0
    %625 = vdwg.mxu0
    %626 = vmatprep.subr.bf16.mxu0 %v490
    %627 = vmatpush1.bf16.msra.mxu0 %v489
    %628 = vmatprep.subr.bf16.mxu0 %v492
    %629 = vmatpush1.bf16.msra.mxu0 %v491
    %630 = vmatprep.subr.bf16.mxu0 %v494
    %631 = vmatpush1.bf16.msra.mxu0 %v493
    %632 = vmatprep.subr.bf16.mxu0 %v496
    %633 = vmatpush1.bf16.msra.mxu0 %v495
    %634 = vmatprep.subr.bf16.mxu0 %v498
    %635 = vmatpush1.bf16.msra.mxu0 %v497
    %636 = vmatprep.subr.bf16.mxu0 %v500
    %637 = vmatpush1.bf16.msra.mxu0 %v499
    %638 = vmatprep.subr.bf16.mxu0 %v502
    %639 = vmatpush1.bf16.msra.mxu0 %v501
    %640 = vmatprep.subr.bf16.mxu0 %v504
    %641 = vmatpush1.bf16.msra.mxu0 %v503
    %642 = vmatprep.subr.bf16.mxu0 %v506
    %643 = vmatpush1.bf16.msra.mxu0 %v505
    %644 = vmatprep.subr.bf16.mxu0 %v508
    %645 = vmatpush1.bf16.msra.mxu0 %v507
    %646 = vmatprep.subr.bf16.mxu0 %v510
    %647 = vmatpush1.bf16.msra.mxu0 %v509
    %648 = vmatprep.subr.bf16.mxu0 %v512
    %649 = vmatpush1.bf16.msra.mxu0 %v511
    %650 = vmatprep.subr.bf16.mxu0 %v514
    %651 = vmatpush1.bf16.msra.mxu0 %v513
    %652 = vmatprep.subr.bf16.mxu0 %v516
    %653 = vmatpush1.bf16.msra.mxu0 %v515
    %654 = vmatprep.subr.bf16.mxu0 %v518
    %655 = vmatpush1.bf16.msra.mxu0 %v517
    %656 = vmatprep.subr.bf16.mxu0 %v520
    %657 = vmatpush1.bf16.msra.mxu0 %v519
    %658 = vmatprep.mubr.bf16.mxu0 %v188
    %659 = vmatmul.mubr.bf16.gmra.mrb[0].mxu0 %v187
    %v660 = vpop.f32.mrb[0].mxu0
    %v661 = vadd.f32 %v620, %v660
    %v662 = vpop.f32.mrb[0].mxu0
    %v663 = vadd.f32 %v622, %v662
    %v664 = vpop.f32.mrb[0].mxu0
    %v665 = vpop.f32.mrb[0].mxu0
    %666 = vdwg.mxu0
    %v667 = vmax.f32 %v661, 0.0
    %v668 = vmax.f32 %v663, 0.0
    %v669 = vpack.c.bf16 %v667, %v667
    %v670 = vpack.c.bf16 %v668, %v668
    %v671 = vld [vmem:[%s5] sm:$0xf]
    %v672 = vld [vmem:[%s5 + $0x4] sm:$0xf]
    %v673 = vld [vmem:[%s5 + $0x8] sm:$0xf]
    %v674 = vld [vmem:[%s5 + $0xc] sm:$0xf]
    %v675 = vld [vmem:[%s5 + $0x10] sm:$0xf]
    %v676 = vld [vmem:[%s5 + $0x14] sm:$0xf]
    %v677 = vld [vmem:[%s5 + $0x18] sm:$0xf]
    %v678 = vld [vmem:[%s5 + $0x1c] sm:$0xf]
    %v679 = vld [vmem:[%s5 + $0x20] sm:$0xf]
    %v680 = vld [vmem:[%s5 + $0x24] sm:$0xf]
    %v681 = vld [vmem:[%s5 + $0x28] sm:$0xf]
    %v682 = vld [vmem:[%s5 + $0x2c] sm:$0xf]
    %v683 = vld [vmem:[%s5 + $0x30] sm:$0xf]
    %v684 = vld [vmem:[%s5 + $0x34] sm:$0xf]
    %v685 = vld [vmem:[%s5 + $0x38] sm:$0xf]
    %v686 = vld [vmem:[%s5 + $0x3c] sm:$0xf]
    %v687 = vld [vmem:[%s5 + $0x40] sm:$0xf]
    %v688 = vld [vmem:[%s5 + $0x44] sm:$0xf]
    %v689 = vld [vmem:[%s5 + $0x48] sm:$0xf]
    %v690 = vld [vmem:[%s5 + $0x4c] sm:$0xf]
    %v691 = vld [vmem:[%s5 + $0x50] sm:$0xf]
    %v692 = vld [vmem:[%s5 + $0x54] sm:$0xf]
    %v693 = vld [vmem:[%s5 + $0x58] sm:$0xf]
    %v694 = vld [vmem:[%s5 + $0x5c] sm:$0xf]
    %v695 = vld [vmem:[%s5 + $0x60] sm:$0xf]
    %v696 = vld [vmem:[%s5 + $0x64] sm:$0xf]
    %v697 = vld [vmem:[%s5 + $0x68] sm:$0xf]
    %v698 = vld [vmem:[%s5 + $0x6c] sm:$0xf]
    %v699 = vld [vmem:[%s5 + $0x70] sm:$0xf]
    %v700 = vld [vmem:[%s5 + $0x74] sm:$0xf]
    %v701 = vld [vmem:[%s5 + $0x78] sm:$0xf]
    %v702 = vld [vmem:[%s5 + $0x7c] sm:$0xf]
    %v703 = vld [vmem:[%s6] sm:$0x1]
    %v705 = vlaneseq
    %v706 = vshrl.u32 %v705, 7
    %v707 = vsub.s32 0, %v706
    %v708 = vrot.slane %v703, %v707
    %v742 = vunpack.c.l.b16 %v671
    %v743 = vunpack.c.l.b16 %v672
    %v744 = vunpack.c.l.b16 %v673
    %v745 = vunpack.c.l.b16 %v674
    %v746 = vunpack.c.l.b16 %v675
    %v747 = vunpack.c.l.b16 %v676
    %v748 = vunpack.c.l.b16 %v677
    %v749 = vunpack.c.l.b16 %v678
    %v750 = vunpack.c.l.b16 %v679
    %v751 = vunpack.c.l.b16 %v680
    %v752 = vunpack.c.l.b16 %v681
    %v753 = vunpack.c.l.b16 %v682
    %v754 = vunpack.c.l.b16 %v683
    %v755 = vunpack.c.l.b16 %v684
    %v756 = vunpack.c.l.b16 %v685
    %v757 = vunpack.c.l.b16 %v686
    %v758 = vunpack.c.l.b16 %v687
    %v759 = vunpack.c.l.b16 %v688
    %v760 = vunpack.c.l.b16 %v689
    %v761 = vunpack.c.l.b16 %v690
    %v762 = vunpack.c.l.b16 %v691
    %v763 = vunpack.c.l.b16 %v692
    %v764 = vunpack.c.l.b16 %v693
    %v765 = vunpack.c.l.b16 %v694
    %v766 = vunpack.c.l.b16 %v695
    %v767 = vunpack.c.l.b16 %v696
    %v768 = vunpack.c.l.b16 %v697
    %v769 = vunpack.c.l.b16 %v698
    %v770 = vunpack.c.l.b16 %v699
    %v771 = vunpack.c.l.b16 %v700
    %v772 = vunpack.c.l.b16 %v701
    %v773 = vunpack.c.l.b16 %v702
    %v774 = vpack.c.b16 %v743, %v742
    %v775 = vpack.c.b16 %v745, %v744
    %v776 = vpack.c.b16 %v747, %v746
    %v777 = vpack.c.b16 %v749, %v748
    %v778 = vpack.c.b16 %v751, %v750
    %v779 = vpack.c.b16 %v753, %v752
    %v780 = vpack.c.b16 %v755, %v754
    %v781 = vpack.c.b16 %v757, %v756
    %v782 = vpack.c.b16 %v759, %v758
    %v783 = vpack.c.b16 %v761, %v760
    %v784 = vpack.c.b16 %v763, %v762
    %v785 = vpack.c.b16 %v765, %v764
    %v786 = vpack.c.b16 %v767, %v766
    %v787 = vpack.c.b16 %v769, %v768
    %v788 = vpack.c.b16 %v771, %v770
    %v789 = vpack.c.b16 %v773, %v772
    %806 = vmatprep.subr.bf16.mxu0 0
    %807 = vmatpush1.bf16.msra.mxu0 %v774
    %808 = vmatprep.subr.bf16.mxu0 0
    %809 = vmatpush1.bf16.msra.mxu0 %v775
    %810 = vmatprep.subr.bf16.mxu0 0
    %811 = vmatpush1.bf16.msra.mxu0 %v776
    %812 = vmatprep.subr.bf16.mxu0 0
    %813 = vmatpush1.bf16.msra.mxu0 %v777
    %814 = vmatprep.subr.bf16.mxu0 0
    %815 = vmatpush1.bf16.msra.mxu0 %v778
    %816 = vmatprep.subr.bf16.mxu0 0
    %817 = vmatpush1.bf16.msra.mxu0 %v779
    %818 = vmatprep.subr.bf16.mxu0 0
    %819 = vmatpush1.bf16.msra.mxu0 %v780
    %820 = vmatprep.subr.bf16.mxu0 0
    %821 = vmatpush1.bf16.msra.mxu0 %v781
    %822 = vmatprep.subr.bf16.mxu0 0
    %823 = vmatpush1.bf16.msra.mxu0 %v782
    %824 = vmatprep.subr.bf16.mxu0 0
    %825 = vmatpush1.bf16.msra.mxu0 %v783
    %826 = vmatprep.subr.bf16.mxu0 0
    %827 = vmatpush1.bf16.msra.mxu0 %v784
    %828 = vmatprep.subr.bf16.mxu0 0
    %829 = vmatpush1.bf16.msra.mxu0 %v785
    %830 = vmatprep.subr.bf16.mxu0 0
    %831 = vmatpush1.bf16.msra.mxu0 %v786
    %832 = vmatprep.subr.bf16.mxu0 0
    %833 = vmatpush1.bf16.msra.mxu0 %v787
    %834 = vmatprep.subr.bf16.mxu0 0
    %835 = vmatpush1.bf16.msra.mxu0 %v788
    %836 = vmatprep.subr.bf16.mxu0 0
    %837 = vmatpush1.bf16.msra.mxu0 %v789
    %838 = vmatprep.mubr.bf16.mxu0 %v670
    %839 = vmatmul.mubr.bf16.gmra.mrb[0].mxu0 %v669
    %v840 = vpop.f32.mrb[0].mxu0
    %v841 = vadd.f32 %v708, %v840
    %v842 = vpop.f32.mrb[0].mxu0
    %v843 = vpop.f32.mrb[0].mxu0
    %v844 = vpop.f32.mrb[0].mxu0
    %845 = vdwg.mxu0
    %v846 = vmax.f32 %v841, 0.0
    %v847 = vpack.c.bf16 %v846, %v846
    %v848 = vld [vmem:[%s7] sm:$0xf]
    %v849 = vld [vmem:[%s7 + $0x4] sm:$0xf]
    %v850 = vld [vmem:[%s7 + $0x8] sm:$0xf]
    %v851 = vld [vmem:[%s7 + $0xc] sm:$0xf]
    %v852 = vld [vmem:[%s7 + $0x10] sm:$0xf]
    %v853 = vld [vmem:[%s7 + $0x14] sm:$0xf]
    %v854 = vld [vmem:[%s7 + $0x18] sm:$0xf]
    %v855 = vld [vmem:[%s7 + $0x1c] sm:$0xf]
    %v856 = vld [vmem:[%s8] sm:$0x1]
    %v858 = vlaneseq
    %v859 = vshrl.u32 %v858, 7
    %v860 = vsub.s32 0, %v859
    %v861 = vrot.slane %v856, %v860
    %v871 = vunpack.c.l.b16 %v848
    %v872 = vunpack.c.l.b16 %v849
    %v873 = vunpack.c.l.b16 %v850
    %v874 = vunpack.c.l.b16 %v851
    %v875 = vunpack.c.l.b16 %v852
    %v876 = vunpack.c.l.b16 %v853
    %v877 = vunpack.c.l.b16 %v854
    %v878 = vunpack.c.l.b16 %v855
    %v879 = vpack.c.b16 %v872, %v871
    %v880 = vpack.c.b16 %v874, %v873
    %v881 = vpack.c.b16 %v876, %v875
    %v882 = vpack.c.b16 %v878, %v877
    %vm887 = vcmask 523264
    %v889 = vsel %vm887, %v847, 0
    %891 = vmatprep.subr.bf16.mxu0 0
    %892 = vmatpush1.bf16.msra.mxu0 %v879
    %893 = vmatprep.subr.bf16.mxu0 0
    %894 = vmatpush1.bf16.msra.mxu0 %v880
    %895 = vmatprep.subr.bf16.mxu0 0
    %896 = vmatpush1.bf16.msra.mxu0 %v881
    %897 = vmatprep.subr.bf16.mxu0 0
    %898 = vmatpush1.bf16.msra.mxu0 %v882
    %899 = vmatprep.subr.bf16.mxu0 0
    %900 = vmatpush1.bf16.msra.mxu0 0
    %901 = vmatprep.subr.bf16.mxu0 0
    %902 = vmatpush1.bf16.msra.mxu0 0
    %903 = vmatprep.subr.bf16.mxu0 0
    %904 = vmatpush1.bf16.msra.mxu0 0
    %905 = vmatprep.subr.bf16.mxu0 0
    %906 = vmatpush1.bf16.msra.mxu0 0
    %907 = vmatprep.subr.bf16.mxu0 0
    %908 = vmatpush1.bf16.msra.mxu0 0
    %909 = vmatprep.subr.bf16.mxu0 0
    %910 = vmatpush1.bf16.msra.mxu0 0
    %911 = vmatprep.subr.bf16.mxu0 0
    %912 = vmatpush1.bf16.msra.mxu0 0
    %913 = vmatprep.subr.bf16.mxu0 0
    %914 = vmatpush1.bf16.msra.mxu0 0
    %915 = vmatprep.subr.bf16.mxu0 0
    %916 = vmatpush1.bf16.msra.mxu0 0
    %917 = vmatprep.subr.bf16.mxu0 0
    %918 = vmatpush1.bf16.msra.mxu0 0
    %919 = vmatprep.subr.bf16.mxu0 0
    %920 = vmatpush1.bf16.msra.mxu0 0
    %921 = vmatprep.subr.bf16.mxu0 0
    %922 = vmatpush1.bf16.msra.mxu0 0
    %923 = vmatprep.mubr.bf16.mxu0 0
    %924 = vmatmul.mubr.bf16.gmra.mrb[0].mxu0 %v889
    %v925 = vpop.f32.mrb[0].mxu0
    %v926 = vadd.f32 %v861, %v925
    %v927 = vpop.f32.mrb[0].mxu0
    %v928 = vpop.f32.mrb[0].mxu0
    %v929 = vpop.f32.mrb[0].mxu0
    %930 = vdwg.mxu0
    %v931 = vtanh.pop %v926
    %932 = vst [vmem:[#allocation5] sm:$0xff] %v931
    // Predicated region
    $region42: #{_actor_forward_mean.1} parent=1 // pred_check
      _
    $region43: #{_actor_forward_mean.1} parent=1 // pred_check_branch
      %934 = sbr.rel (0) target = $region45
    $region44: #{_actor_forward_mean.1} parent=1 // pred_region
      %s936 = ssub.s32 128, 128
      %937 = vsyncadd [#allocation4], %s936
      %s939 = sshll.u32 [#allocation5], 4
      %s940 = int_to_ptr.vmem [resolvable:$true] %s939
      %942 = dma.vmem_to_hbm [thread:$0]  %s940, 128, %s9, [#allocation4]
    $region45: #{_actor_forward_mean.1} parent=1 // pred_fallthru
      _
    // Predicated region
    $region46: #{_actor_forward_mean.1} parent=1 // pred_check
      _
    $region47: #{_actor_forward_mean.1} parent=1 // pred_check_branch
      %944 = sbr.rel (0) target = $region49
    $region48: #{_actor_forward_mean.1} parent=1 // pred_region
      %945 = dma.done [#allocation4], 128
    $region49: #{_actor_forward_mean.1} parent=1 // pred_fallthru
      _
    %946 = vsyncpa [#allocation3], 1
    %947 = vsyncpa [#allocation4], 1

</llo_original>
